<compile_context>
chip_gen: v7x
topology: tpu7x:2x2x1
jax: 0.10.0
libtpu: 0.0.40
codegen_flags: <defaults>
</compile_context>

<pallas_src>
import math

import jax
import jax.numpy as jnp
import numpy as np
from jax.experimental import pallas as pl
from jax.experimental.pallas import tpu as pltpu

INV_SQRT2 = 1.0 / math.sqrt(2.0)
EPS = 1e-6


# --------------------------------------------------------------------------
# helpers used inside kernels (traced, not pallas_calls themselves)
# --------------------------------------------------------------------------
def _vmem_spec():
    # whole-array-in-VMEM spec (all tensors here are tiny)
    return pl.BlockSpec(memory_space=pltpu.MemorySpace.VMEM)


def _layernorm(x, g, b):
    # LayerNorm over the last (channel) dim, eps=1e-6; rsqrt -> EUP slot.
    mu = jnp.mean(x, axis=-1, keepdims=True)
    var = jnp.mean(jnp.square(x - mu), axis=-1, keepdims=True)
    return (x - mu) * jax.lax.rsqrt(var + EPS) * g + b


def _mm(a, w_bf16, b_f32):
    # bf16 MXU matmul with f32 accumulation and f32 bias.
    return (
        jnp.dot(a.astype(jnp.bfloat16), w_bf16, preferred_element_type=jnp.float32)
        + b_f32
    )


# --------------------------------------------------------------------------
# Pallas kernels
# --------------------------------------------------------------------------
def stem_kernel(x_ref, w_ref, b_ref, g_ref, bb_ref, o_ref):
    # fused: Conv2d(k=4,s=4) as patch-matmul + bias, then LayerNorm(channels_first)
    y = _mm(x_ref[...], w_ref[...], b_ref[...])
    o_ref[...] = _layernorm(y, g_ref[...], bb_ref[...])


def downsample_kernel(x_ref, w_ref, b_ref, o_ref):
    # Conv2d(k=2,s=2) as patch-matmul + bias (its LayerNorm is fused into the
    # tail of the previous stage's last block).
    o_ref[...] = _mm(x_ref[...], w_ref[...], b_ref[...])


def make_block_kernel(N, H, W, C, tail):
    """ConvNeXtV2 block, fused end-to-end for the whole batch.

    tail:
      "none"  -> write (N*H*W, C) features
      "ds_ln" -> also apply the following downsample LayerNorm before writing
      "head"  -> mean-pool over spatial, final LayerNorm, all heads (one matmul)
    """
    HW = H * W

    def kernel(*refs):
        it = iter(refs)
        xpad_ref = next(it)                       # (N, H+6, W+6, C) f32
        dw_w_ref = next(it); dw_b_ref = next(it)  # (49, C), (1, C)
        ln_g_ref = next(it); ln_b_ref = next(it)  # (1, C)
        w1_ref = next(it); b1_ref = next(it)      # (C, 4C) bf16, (1, 4C)
        grn_g_ref = next(it); grn_b_ref = next(it)  # (1, 4C)
        w2_ref = next(it); b2_ref = next(it)      # (4C, C) bf16, (1, C)
        if tail == "ds_ln":
            tg_ref = next(it); tb_ref = next(it)  # (1, C)
        elif tail == "head":
            ng_ref = next(it); nb_ref = next(it)  # (1, C)
            hw_ref = next(it); hb_ref = next(it)  # (C, O) bf16, (1, O)
        o_ref = next(it)

        xpad = xpad_ref[...]                      # (N, H+6, W+6, C)
        xres = xpad[:, 3:3 + H, 3:3 + W, :]       # residual = centre of the pad

        # ---- depthwise 7x7 conv: 49 shifted multiply-adds, per channel ----
        acc = jnp.zeros((N, H, W, C), jnp.float32)
        for i in range(7):
            for j in range(7):
                acc = acc + xpad[:, i:i + H, j:j + W, :] * dw_w_ref[i * 7 + j]
        acc = acc + dw_b_ref[...]

        # ---- LayerNorm (channels_last, eps=1e-6) ----
        y = _layernorm(acc.reshape(N * HW, C), ln_g_ref[...], ln_b_ref[...])

        # ---- pwconv1 (M = N*H*W) + exact erf-GELU ----
        h = _mm(y, w1_ref[...], b1_ref[...])
        h = 0.5 * h * (1.0 + jax.lax.erf(h * INV_SQRT2))

        # ---- GRN: per-sample global response normalization over spatial ----
        h3 = h.reshape(N, HW, 4 * C)
        gx = jnp.sqrt(jnp.sum(h3 * h3, axis=1, keepdims=True))       # (N, 1, 4C)
        nx = gx / (jnp.mean(gx, axis=-1, keepdims=True) + EPS)
        h3 = grn_g_ref[...] * (h3 * nx) + grn_b_ref[...] + h3

        # ---- pwconv2 + residual (drop_path == Identity at rate 0) ----
        z = _mm(h3.reshape(N * HW, 4 * C), w2_ref[...], b2_ref[...])
        out = xres.reshape(N * HW, C) + z

        if tail == "none":
            o_ref[...] = out
        elif tail == "ds_ln":
            # fused LayerNorm of the *next* downsample layer (channels_first)
            o_ref[...] = _layernorm(out, tg_ref[...], tb_ref[...])
        else:  # "head": global mean pool + final LayerNorm + fused heads
            feat = jnp.mean(out.reshape(N, HW, C), axis=1)            # (N, C)
            feat = _layernorm(feat, ng_ref[...], nb_ref[...])
            o_ref[...] = _mm(feat, hw_ref[...], hb_ref[...])

    return kernel


# --------------------------------------------------------------------------
# Pallas wrappers
# --------------------------------------------------------------------------
def run_stem(xp_flat, p):
    R = xp_flat.shape[0]
    C = p["stem_w"].shape[1]
    return pl.pallas_call(
        stem_kernel,
        out_shape=jax.ShapeDtypeStruct((R, C), jnp.float32),
        in_specs=[_vmem_spec()] * 5,
        out_specs=_vmem_spec(),
    )(xp_flat, p["stem_w"], p["stem_b"], p["stem_ln_g"], p["stem_ln_b"])


def run_downsample(xp_flat, w, b):
    return pl.pallas_call(
        downsample_kernel,
        out_shape=jax.ShapeDtypeStruct((xp_flat.shape[0], w.shape[1]), jnp.float32),
        in_specs=[_vmem_spec()] * 3,
        out_specs=_vmem_spec(),
    )(xp_flat, w, b)


def run_block(x, blk, tail="none", tail_params=None):
    # x: (N, H, W, C) NHWC
    N, H, W, C = x.shape
    # TODO(synk): the 3-px halo is still materialized by XLA here; folding it
    # into the producing kernel's output write would remove this HBM copy.
    xpad = jnp.pad(x, ((0, 0), (3, 3), (3, 3), (0, 0)))

    inputs = [xpad,
              blk["dw_w"], blk["dw_b"], blk["ln_g"], blk["ln_b"],
              blk["w1"], blk["b1"], blk["grn_g"], blk["grn_b"],
              blk["w2"], blk["b2"]]
    if tail == "ds_ln":
        inputs += [tail_params["ln_g"], tail_params["ln_b"]]
        out_shape = jax.ShapeDtypeStruct((N * H * W, C), jnp.float32)
    elif tail == "head":
        inputs += [tail_params["norm_g"], tail_params["norm_b"],
                   tail_params["head_w"], tail_params["head_b"]]
        out_shape = jax.ShapeDtypeStruct(
            (N, tail_params["head_w"].shape[1]), jnp.float32)
    else:
        out_shape = jax.ShapeDtypeStruct((N * H * W, C), jnp.float32)

    return pl.pallas_call(
        make_block_kernel(N, H, W, C, tail),
        out_shape=out_shape,
        in_specs=[_vmem_spec()] * len(inputs),
        out_specs=_vmem_spec(),
    )(*inputs)


# --------------------------------------------------------------------------
# Parameter construction + forward (layout glue in plain JAX)
# --------------------------------------------------------------------------
def space_to_depth(x, k):
    # (N, H, W, C) -> (N, H/k, W/k, k*k*C), patch ordering (di, dj, c)
    N, H, W, C = x.shape
    x = x.reshape(N, H // k, k, W // k, k, C)
    x = jnp.transpose(x, (0, 1, 3, 2, 4, 5))
    return x.reshape(N, H // k, W // k, k * k * C)


def init_params(key, in_chans=3, depths=(1, 1, 1, 1), dims=(16, 32, 64, 128),
                num_bins=66, num_kp=24):
    keys = jax.random.split(key, 64)
    ki = iter(keys)

    def w_init(shape, dtype=jnp.bfloat16):
        # TODO(synk): trunc_normal_ approximated by plain normal (deterministic synthetic init)
        return (jax.random.normal(next(ki), shape, jnp.float32) * 0.02).astype(dtype)

    p = {}
    # stem: Conv2d(in_chans, dims[0], k=4, s=4) as (4*4*in_chans, dims[0]) matmul
    p["stem_w"] = w_init((4 * 4 * in_chans, dims[0]))           # bf16 MXU weight
    p["stem_b"] = jnp.zeros((1, dims[0]), jnp.float32)
    p["stem_ln_g"] = jnp.ones((1, dims[0]), jnp.float32)
    p["stem_ln_b"] = jnp.zeros((1, dims[0]), jnp.float32)

    # downsample layers 1..3: LayerNorm(channels_first) + Conv2d(k=2, s=2)
    p["ds"] = []
    for i in range(3):
        p["ds"].append({
            "ln_g": jnp.ones((1, dims[i]), jnp.float32),
            "ln_b": jnp.zeros((1, dims[i]), jnp.float32),
            "w": w_init((2 * 2 * dims[i], dims[i + 1])),
            "b": jnp.zeros((1, dims[i + 1]), jnp.float32),
        })

    # stages of ConvNeXtV2 blocks
    p["stages"] = []
    for i in range(4):
        blocks = []
        for _ in range(depths[i]):
            C = dims[i]
            blocks.append({
                "dw_w": w_init((49, C), jnp.float32),   # depthwise taps: VPU, f32
                "dw_b": jnp.zeros((1, C), jnp.float32),
                "ln_g": jnp.ones((1, C), jnp.float32),
                "ln_b": jnp.zeros((1, C), jnp.float32),
                "w1": w_init((C, 4 * C)),
                "b1": jnp.zeros((1, 4 * C), jnp.float32),
                "grn_g": jnp.zeros((1, 4 * C), jnp.float32),  # GRN gamma init 0
                "grn_b": jnp.zeros((1, 4 * C), jnp.float32),  # GRN beta init 0
                "w2": w_init((4 * C, C)),
                "b2": jnp.zeros((1, C), jnp.float32),
            })
        p["stages"].append(blocks)

    D = dims[-1]
    p["norm_g"] = jnp.ones((1, D), jnp.float32)
    p["norm_b"] = jnp.zeros((1, D), jnp.float32)

    # fused classification heads: [kp, pitch, yaw, roll, t, exp, scale]
    head_dims = [3 * num_kp, num_bins, num_bins, num_bins, 3, 3 * num_kp, 1]
    p["head_dims"] = head_dims
    p["head_w"] = w_init((D, sum(head_dims)))
    p["head_b"] = jnp.zeros((1, sum(head_dims)), jnp.float32)
    return p


def convnextv2_forward(params, x_nchw):
    # external layout NCHW (PyTorch) -> NHWC internally
    x = jnp.transpose(x_nchw, (0, 2, 3, 1)).astype(jnp.float32)

    # ---- stem: conv4x4 s4 as patch-matmul fused with its LayerNorm ----
    xp = space_to_depth(x, 4)
    N, Hs, Ws, K = xp.shape
    y = run_stem(xp.reshape(N * Hs * Ws, K), params)
    x = y.reshape(N, Hs, Ws, -1)

    head_out = None
    for i in range(4):
        if i > 0:
            # downsample conv2x2 s2 (its LayerNorm was fused into the tail of
            # the previous stage's last block, so only the matmul runs here)
            ds = params["ds"][i - 1]
            xp = space_to_depth(x, 2)
            N, Hs, Ws, K = xp.shape
            y = run_downsample(xp.reshape(N * Hs * Ws, K), ds["w"], ds["b"])
            x = y.reshape(N, Hs, Ws, -1)

        blocks = params["stages"][i]
        for j, blk in enumerate(blocks):
            last = j == len(blocks) - 1
            if last and i < 3:
                tail, tp = "ds_ln", params["ds"][i]
            elif last and i == 3:
                tail = "head"
                tp = {"norm_g": params["norm_g"], "norm_b": params["norm_b"],
                      "head_w": params["head_w"], "head_b": params["head_b"]}
            else:
                tail, tp = "none", None

            out = run_block(x, blk, tail, tp)
            if tail == "head":
                head_out = out
            else:
                Nc, Hc, Wc, Cc = x.shape
                x = out.reshape(Nc, Hc, Wc, Cc)

    hd = params["head_dims"]
    offs = np.cumsum([0] + hd)
    parts = [head_out[:, int(offs[k]):int(offs[k + 1])] for k in range(len(hd))]
    kp, pitch, yaw, roll, t, exp_, scale = parts
    return {"pitch": pitch, "yaw": yaw, "roll": roll, "t": t,
            "exp": exp_, "scale": scale, "kp": kp}


# --------------------------------------------------------------------------
if __name__ == "__main__":
    key = jax.random.PRNGKey(0)
    pkey, xkey = jax.random.split(key)

    # small-but-consistent config: depths (1,1,1,1), dims (16,32,64,128)
    params = init_params(pkey, in_chans=3, depths=(1, 1, 1, 1),
                         dims=(16, 32, 64, 128), num_bins=66, num_kp=24)

    # input: batch=2, 3 channels, 32x32 spatial (NCHW, like the PyTorch module)
    x = jax.random.normal(xkey, (2, 3, 32, 32), jnp.float32)

    out = convnextv2_forward(params, x)
    jax.block_until_ready(out)

    # sanity-check output shapes match the PyTorch heads
    assert out["kp"].shape == (2, 72)
    assert out["pitch"].shape == (2, 66)
    assert out["yaw"].shape == (2, 66)
    assert out["roll"].shape == (2, 66)
    assert out["t"].shape == (2, 3)
    assert out["exp"].shape == (2, 72)
    assert out["scale"].shape == (2, 1)

    print("KERNEL_OK")
</pallas_src>

<mosaic_0001>
module attributes {stable_mosaic.version = 11 : i64} {
  func.func @stem_kernel(%arg0: memref<128x48xf32, #tpu.memory_space<vmem>>, %arg1: memref<48x16xbf16, #tpu.memory_space<vmem>>, %arg2: memref<1x16xf32, #tpu.memory_space<vmem>>, %arg3: memref<1x16xf32, #tpu.memory_space<vmem>>, %arg4: memref<1x16xf32, #tpu.memory_space<vmem>>, %arg5: memref<128x16xf32, #tpu.memory_space<vmem>>) attributes {dimension_semantics = [], scalar_prefetch = 0 : i64, scratch_operands = 0 : i64, tpu.core_type = #tpu.core_type<tc>} {
    %c0 = arith.constant 0 : index
    %c0_0 = arith.constant 0 : index
    %0 = vector.load %arg0[%c0, %c0_0] : memref<128x48xf32, #tpu.memory_space<vmem>>, vector<128x48xf32>
    %c0_1 = arith.constant 0 : index
    %c0_2 = arith.constant 0 : index
    %1 = vector.load %arg1[%c0_1, %c0_2] : memref<48x16xbf16, #tpu.memory_space<vmem>>, vector<48x16xbf16>
    %c0_3 = arith.constant 0 : index
    %c0_4 = arith.constant 0 : index
    %2 = vector.load %arg2[%c0_3, %c0_4] : memref<1x16xf32, #tpu.memory_space<vmem>>, vector<1x16xf32>
    %3 = arith.truncf %0 : vector<128x48xf32> to vector<128x48xbf16>
    %cst = arith.constant dense<0.000000e+00> : vector<128x16xf32>
    %4 = tpu.matmul %3, %1, %cst {dimension_numbers = #tpu.dot_dimension_numbers<[1], [0], [0], [1], [0, 0, 1, 1], [], []>} : vector<128x48xbf16>, vector<48x16xbf16>, vector<128x16xf32> -> vector<128x16xf32>
    %5 = vector.broadcast %2 : vector<1x16xf32> to vector<128x16xf32>
    %6 = arith.addf %4, %5 : vector<128x16xf32>
    %c0_5 = arith.constant 0 : index
    %c0_6 = arith.constant 0 : index
    %7 = vector.load %arg3[%c0_5, %c0_6] : memref<1x16xf32, #tpu.memory_space<vmem>>, vector<1x16xf32>
    %c0_7 = arith.constant 0 : index
    %c0_8 = arith.constant 0 : index
    %8 = vector.load %arg4[%c0_7, %c0_8] : memref<1x16xf32, #tpu.memory_space<vmem>>, vector<1x16xf32>
    %cst_9 = arith.constant dense<0.000000e+00> : vector<128xf32>
    %9 = vector.multi_reduction <add>, %6, %cst_9 [1] : vector<128x16xf32> to vector<128xf32>
    %10 = vector.shape_cast %9 : vector<128xf32> to vector<128x1xf32>
    %cst_10 = arith.constant 1.600000e+01 : f32
    %11 = vector.broadcast %cst_10 : f32 to vector<128x1xf32>
    %12 = arith.divf %10, %11 : vector<128x1xf32>
    %13 = vector.broadcast %12 : vector<128x1xf32> to vector<128x16xf32>
    %14 = arith.subf %6, %13 : vector<128x16xf32>
    %15 = arith.mulf %14, %14 : vector<128x16xf32>
    %cst_11 = arith.constant dense<0.000000e+00> : vector<128xf32>
    %16 = vector.multi_reduction <add>, %15, %cst_11 [1] : vector<128x16xf32> to vector<128xf32>
    %17 = vector.shape_cast %16 : vector<128xf32> to vector<128x1xf32>
    %cst_12 = arith.constant 1.600000e+01 : f32
    %18 = vector.broadcast %cst_12 : f32 to vector<128x1xf32>
    %19 = arith.divf %17, %18 : vector<128x1xf32>
    %20 = vector.broadcast %12 : vector<128x1xf32> to vector<128x16xf32>
    %21 = arith.subf %6, %20 : vector<128x16xf32>
    %cst_13 = arith.constant 9.99999997E-7 : f32
    %22 = vector.broadcast %cst_13 : f32 to vector<128x1xf32>
    %23 = arith.addf %19, %22 : vector<128x1xf32>
    %24 = math.rsqrt %23 : vector<128x1xf32>
    %25 = vector.broadcast %24 : vector<128x1xf32> to vector<128x16xf32>
    %26 = arith.mulf %21, %25 : vector<128x16xf32>
    %27 = vector.broadcast %7 : vector<1x16xf32> to vector<128x16xf32>
    %28 = arith.mulf %26, %27 : vector<128x16xf32>
    %29 = vector.broadcast %8 : vector<1x16xf32> to vector<128x16xf32>
    %30 = arith.addf %28, %29 : vector<128x16xf32>
    %c0_14 = arith.constant 0 : index
    %c0_15 = arith.constant 0 : index
    %31 = vector.load %arg5[%c0_14, %c0_15] : memref<128x16xf32, #tpu.memory_space<vmem>>, vector<128x16xf32>
    tpu.vector_store %arg5[%c0_14, %c0_15], %30 {strides = array<i32>} : memref<128x16xf32, #tpu.memory_space<vmem>>, vector<128x16xf32>,
    return
  }
}

</mosaic_0001>

<llo_original>
// kernel: tpu_custom_call.1
$region0: #{tpu_custom_call.1}
  #allocation0 [shape = 'u32[]', space=smem, size = 0x4, offset = 0x4, fixed_abs, tag = 'smem constant byte address 0x4 - core index']
  #allocation1 [shape = 'u32[144,128]{1,0:T(1,128)}', space=vmem, size = 0x12000, scoped, tag = 'internal scratch']
  %s0 = inlined_call_operand.vmem [shape: f32[128,48], index: 0, kind: input, shape index: {}]
  %s1 = inlined_call_operand.vmem [shape: bf16[48,16], index: 1, kind: input, shape index: {}]
  %s2 = inlined_call_operand.vmem [shape: f32[1,16], index: 2, kind: input, shape index: {}]
  %s3 = inlined_call_operand.vmem [shape: f32[1,16], index: 3, kind: input, shape index: {}]
  %s4 = inlined_call_operand.vmem [shape: f32[1,16], index: 4, kind: input, shape index: {}]
  %s5 = inlined_call_operand.vmem [shape: f32[128,16], index: 5, kind: output, shape index: {}]
  %s6 = sld [smem:[#allocation0]]
  $region30: #{tpu_custom_call.1} parent=0
    _
  %s8 = ssub.s32 1, %s6
  %s9 = scalar_select 0, %s8, %s6
  // Predicated region
  $region2: #{tpu_custom_call.1} parent=0 // pred_check
    _
  $region3: #{tpu_custom_call.1} parent=0 // pred_check_branch
    %11 = sbr.rel (0) target = $region5
  $region4: #{tpu_custom_call.1} parent=0 // pred_region
    _
  $region5: #{tpu_custom_call.1} parent=0 // pred_fallthru
    _
  // Predicated region
  $region6: #{tpu_custom_call.1} parent=0 // pred_check
    _
  $region7: #{tpu_custom_call.1} parent=0 // pred_check_branch
    %13 = sbr.rel (0) target = $region9
  $region8: #{tpu_custom_call.1} parent=0 // pred_region
    _
  $region9: #{tpu_custom_call.1} parent=0 // pred_fallthru
    _
  // Predicated region
  $region10: #{tpu_custom_call.1} parent=0 // pred_check
    _
  $region11: #{tpu_custom_call.1} parent=0 // pred_check_branch
    %15 = sbr.rel (0) target = $region13
  $region12: #{tpu_custom_call.1} parent=0 // pred_region
    _
  $region13: #{tpu_custom_call.1} parent=0 // pred_fallthru
    _
  // Predicated region
  $region14: #{tpu_custom_call.1} parent=0 // pred_check
    _
  $region15: #{tpu_custom_call.1} parent=0 // pred_check_branch
    %17 = sbr.rel (0) target = $region17
  $region16: #{tpu_custom_call.1} parent=0 // pred_region
    _
  $region17: #{tpu_custom_call.1} parent=0 // pred_fallthru
    _
  // Predicated region
  $region18: #{tpu_custom_call.1} parent=0 // pred_check
    _
  $region19: #{tpu_custom_call.1} parent=0 // pred_check_branch
    %19 = sbr.rel (0) target = $region21
  $region20: #{tpu_custom_call.1} parent=0 // pred_region
    _
  $region21: #{tpu_custom_call.1} parent=0 // pred_fallthru
    _
  %v21 = vld [vmem:[%s0] sm:$0xff]
  %v22 = vld [vmem:[%s0 + $0x8] sm:$0xff]
  %v23 = vld [vmem:[%s0 + $0x10] sm:$0xff]
  %v24 = vld [vmem:[%s0 + $0x18] sm:$0xff]
  %v25 = vld [vmem:[%s0 + $0x20] sm:$0xff]
  %v26 = vld [vmem:[%s0 + $0x28] sm:$0xff]
  %v27 = vld [vmem:[%s0 + $0x30] sm:$0xff]
  %v28 = vld [vmem:[%s0 + $0x38] sm:$0xff]
  %v29 = vld [vmem:[%s0 + $0x40] sm:$0xff]
  %v30 = vld [vmem:[%s0 + $0x48] sm:$0xff]
  %v31 = vld [vmem:[%s0 + $0x50] sm:$0xff]
  %v32 = vld [vmem:[%s0 + $0x58] sm:$0xff]
  %v33 = vld [vmem:[%s0 + $0x60] sm:$0xff]
  %v34 = vld [vmem:[%s0 + $0x68] sm:$0xff]
  %v35 = vld [vmem:[%s0 + $0x70] sm:$0xff]
  %v36 = vld [vmem:[%s0 + $0x78] sm:$0xff]
  %v37 = vld [vmem:[%s1] sm:$0xf]
  %v38 = vld [vmem:[%s1 + $0x4] sm:$0xf]
  %v39 = vld [vmem:[%s1 + $0x8] sm:$0xf]
  %v40 = vld [vmem:[%s1 + $0xc] sm:$0xf]
  %v41 = vld [vmem:[%s1 + $0x10] sm:$0xf]
  %v42 = vld [vmem:[%s1 + $0x14] sm:$0xf]
  %v43 = vld [vmem:[%s2] sm:$0x1]
  %v44 = vpack.c.bf16 %v22, %v21
  %v45 = vpack.c.bf16 %v24, %v23
  %v46 = vpack.c.bf16 %v26, %v25
  %v47 = vpack.c.bf16 %v28, %v27
  %v48 = vpack.c.bf16 %v30, %v29
  %v49 = vpack.c.bf16 %v32, %v31
  %v50 = vpack.c.bf16 %v34, %v33
  %v51 = vpack.c.bf16 %v36, %v35
  %v53 = vlaneseq
  %v54 = vshrl.u32 %v53, 7
  %v55 = vsub.s32 0, %v54
  %v56 = vrot.slane %v43, %v55
  %v64 = vunpack.c.l.b16 %v37
  %v65 = vunpack.c.l.b16 %v38
  %v66 = vunpack.c.l.b16 %v39
  %v67 = vunpack.c.l.b16 %v40
  %v68 = vunpack.c.l.b16 %v41
  %v69 = vunpack.c.l.b16 %v42
  %v70 = vpack.c.b16 %v65, %v64
  %v71 = vpack.c.b16 %v67, %v66
  %v72 = vpack.c.b16 %v69, %v68
  %vm76 = vcmask 392192
  %v78 = vsel %vm76, %v44, 0
  %v81 = vsel %vm76, %v45, 0
  %v84 = vsel %vm76, %v46, 0
  %v87 = vsel %vm76, %v47, 0
  %v90 = vsel %vm76, %v48, 0
  %v93 = vsel %vm76, %v49, 0
  %v96 = vsel %vm76, %v50, 0
  %v99 = vsel %vm76, %v51, 0
  %101 = vmatprep.subr.bf16.mxu0 0
  %102 = vmatpush1.bf16.msra.mxu0 %v70
  %103 = vmatprep.subr.bf16.mxu0 0
  %104 = vmatpush1.bf16.msra.mxu0 %v71
  %105 = vmatprep.subr.bf16.mxu0 0
  %106 = vmatpush1.bf16.msra.mxu0 %v72
  %107 = vmatprep.subr.bf16.mxu0 0
  %108 = vmatpush1.bf16.msra.mxu0 0
  %109 = vmatprep.subr.bf16.mxu0 0
  %110 = vmatpush1.bf16.msra.mxu0 0
  %111 = vmatprep.subr.bf16.mxu0 0
  %112 = vmatpush1.bf16.msra.mxu0 0
  %113 = vmatprep.subr.bf16.mxu0 0
  %114 = vmatpush1.bf16.msra.mxu0 0
  %115 = vmatprep.subr.bf16.mxu0 0
  %116 = vmatpush1.bf16.msra.mxu0 0
  %117 = vmatprep.subr.bf16.mxu0 0
  %118 = vmatpush1.bf16.msra.mxu0 0
  %119 = vmatprep.subr.bf16.mxu0 0
  %120 = vmatpush1.bf16.msra.mxu0 0
  %121 = vmatprep.subr.bf16.mxu0 0
  %122 = vmatpush1.bf16.msra.mxu0 0
  %123 = vmatprep.subr.bf16.mxu0 0
  %124 = vmatpush1.bf16.msra.mxu0 0
  %125 = vmatprep.subr.bf16.mxu0 0
  %126 = vmatpush1.bf16.msra.mxu0 0
  %127 = vmatprep.subr.bf16.mxu0 0
  %128 = vmatpush1.bf16.msra.mxu0 0
  %129 = vmatprep.subr.bf16.mxu0 0
  %130 = vmatpush1.bf16.msra.mxu0 0
  %131 = vmatprep.subr.bf16.mxu0 0
  %132 = vmatpush1.bf16.msra.mxu0 0
  %133 = vmatprep.mubr.bf16.mxu0 0
  %134 = vmatmul.mubr.bf16.gmra.mrb[0].mxu0 %v78
  %v135 = vpop.f32.mrb[0].mxu0
  %v136 = vadd.f32 %v56, %v135
  %v137 = vpop.f32.mrb[0].mxu0
  %v138 = vpop.f32.mrb[0].mxu0
  %v139 = vadd.f32 %v56, %v138
  %v140 = vpop.f32.mrb[0].mxu0
  %141 = vmatprep.mubr.bf16.mxu0 0
  %142 = vmatmul.mubr.bf16.gmra.mrb[0].mxu0 %v81
  %v143 = vpop.f32.mrb[0].mxu0
  %v144 = vadd.f32 %v56, %v143
  %v145 = vpop.f32.mrb[0].mxu0
  %v146 = vpop.f32.mrb[0].mxu0
  %v147 = vadd.f32 %v56, %v146
  %v148 = vpop.f32.mrb[0].mxu0
  %149 = vmatprep.mubr.bf16.mxu0 0
  %150 = vmatmul.mubr.bf16.gmra.mrb[0].mxu0 %v84
  %v151 = vpop.f32.mrb[0].mxu0
  %v152 = vadd.f32 %v56, %v151
  %v153 = vpop.f32.mrb[0].mxu0
  %v154 = vpop.f32.mrb[0].mxu0
  %v155 = vadd.f32 %v56, %v154
  %v156 = vpop.f32.mrb[0].mxu0
  %157 = vmatprep.mubr.bf16.mxu0 0
  %158 = vmatmul.mubr.bf16.gmra.mrb[0].mxu0 %v87
  %v159 = vpop.f32.mrb[0].mxu0
  %v160 = vadd.f32 %v56, %v159
  %v161 = vpop.f32.mrb[0].mxu0
  %v162 = vpop.f32.mrb[0].mxu0
  %v163 = vadd.f32 %v56, %v162
  %v164 = vpop.f32.mrb[0].mxu0
  %165 = vmatprep.mubr.bf16.mxu0 0
  %166 = vmatmul.mubr.bf16.gmra.mrb[0].mxu0 %v90
  %v167 = vpop.f32.mrb[0].mxu0
  %v168 = vadd.f32 %v56, %v167
  %v169 = vpop.f32.mrb[0].mxu0
  %v170 = vpop.f32.mrb[0].mxu0
  %v171 = vadd.f32 %v56, %v170
  %v172 = vpop.f32.mrb[0].mxu0
  %173 = vmatprep.mubr.bf16.mxu0 0
  %174 = vmatmul.mubr.bf16.gmra.mrb[0].mxu0 %v93
  %v175 = vpop.f32.mrb[0].mxu0
  %v176 = vadd.f32 %v56, %v175
  %v177 = vpop.f32.mrb[0].mxu0
  %v178 = vpop.f32.mrb[0].mxu0
  %v179 = vadd.f32 %v56, %v178
  %v180 = vpop.f32.mrb[0].mxu0
  %181 = vmatprep.mubr.bf16.mxu0 0
  %182 = vmatmul.mubr.bf16.gmra.mrb[0].mxu0 %v96
  %v183 = vpop.f32.mrb[0].mxu0
  %v184 = vadd.f32 %v56, %v183
  %v185 = vpop.f32.mrb[0].mxu0
  %v186 = vpop.f32.mrb[0].mxu0
  %v187 = vadd.f32 %v56, %v186
  %v188 = vpop.f32.mrb[0].mxu0
  %189 = vmatprep.mubr.bf16.mxu0 0
  %190 = vmatmul.mubr.bf16.gmra.mrb[0].mxu0 %v99
  %v191 = vpop.f32.mrb[0].mxu0
  %v192 = vadd.f32 %v56, %v191
  %v193 = vpop.f32.mrb[0].mxu0
  %v194 = vpop.f32.mrb[0].mxu0
  %v195 = vadd.f32 %v56, %v194
  %v196 = vpop.f32.mrb[0].mxu0
  %197 = vdwg.mxu0
  %v198 = vld [vmem:[%s3] sm:$0x1]
  %v199 = vld [vmem:[%s4] sm:$0x1]
  %vm200 = vcmask 130048
  %v201 = vsel %vm200, %v136, 0.0
  %202 = vadd.xlane.f32.xlu0 %v201
  %v203 = vpop.xlane.xlu0 %202
  %v204 = vsel %vm200, %v139, 0.0
  %205 = vadd.xlane.f32.xlu0 %v204
  %v206 = vpop.xlane.xlu0 %205
  %v207 = vsel %vm200, %v144, 0.0
  %208 = vadd.xlane.f32.xlu0 %v207
  %v209 = vpop.xlane.xlu0 %208
  %v210 = vsel %vm200, %v147, 0.0
  %211 = vadd.xlane.f32.xlu0 %v210
  %v212 = vpop.xlane.xlu0 %211
  %v213 = vsel %vm200, %v152, 0.0
  %214 = vadd.xlane.f32.xlu0 %v213
  %v215 = vpop.xlane.xlu0 %214
  %v216 = vsel %vm200, %v155, 0.0
  %217 = vadd.xlane.f32.xlu0 %v216
  %v218 = vpop.xlane.xlu0 %217
  %v219 = vsel %vm200, %v160, 0.0
  %220 = vadd.xlane.f32.xlu0 %v219
  %v221 = vpop.xlane.xlu0 %220
  %v222 = vsel %vm200, %v163, 0.0
  %223 = vadd.xlane.f32.xlu0 %v222
  %v224 = vpop.xlane.xlu0 %223
  %v225 = vsel %vm200, %v168, 0.0
  %226 = vadd.xlane.f32.xlu0 %v225
  %v227 = vpop.xlane.xlu0 %226
  %v228 = vsel %vm200, %v171, 0.0
  %229 = vadd.xlane.f32.xlu0 %v228
  %v230 = vpop.xlane.xlu0 %229
  %v231 = vsel %vm200, %v176, 0.0
  %232 = vadd.xlane.f32.xlu0 %v231
  %v233 = vpop.xlane.xlu0 %232
  %v234 = vsel %vm200, %v179, 0.0
  %235 = vadd.xlane.f32.xlu0 %v234
  %v236 = vpop.xlane.xlu0 %235
  %v237 = vsel %vm200, %v184, 0.0
  %238 = vadd.xlane.f32.xlu0 %v237
  %v239 = vpop.xlane.xlu0 %238
  %v240 = vsel %vm200, %v187, 0.0
  %241 = vadd.xlane.f32.xlu0 %v240
  %v242 = vpop.xlane.xlu0 %241
  %v243 = vsel %vm200, %v192, 0.0
  %244 = vadd.xlane.f32.xlu0 %v243
  %v245 = vpop.xlane.xlu0 %244
  %v246 = vsel %vm200, %v195, 0.0
  %247 = vadd.xlane.f32.xlu0 %v246
  %v248 = vpop.xlane.xlu0 %247
  %v249 = vrcp.pop 16.0
  %v250 = vmul.f32 %v203, %v249
  %v251 = vmul.f32 %v206, %v249
  %v252 = vmul.f32 %v209, %v249
  %v253 = vmul.f32 %v212, %v249
  %v254 = vmul.f32 %v215, %v249
  %v255 = vmul.f32 %v218, %v249
  %v256 = vmul.f32 %v221, %v249
  %v257 = vmul.f32 %v224, %v249
  %v258 = vmul.f32 %v227, %v249
  %v259 = vmul.f32 %v230, %v249
  %v260 = vmul.f32 %v233, %v249
  %v261 = vmul.f32 %v236, %v249
  %v262 = vmul.f32 %v239, %v249
  %v263 = vmul.f32 %v242, %v249
  %v264 = vmul.f32 %v245, %v249
  %v265 = vmul.f32 %v248, %v249
  %v266 = vsub.f32 %v136, %v250
  %v267 = vsub.f32 %v139, %v251
  %v268 = vsub.f32 %v144, %v252
  %v269 = vsub.f32 %v147, %v253
  %v270 = vsub.f32 %v152, %v254
  %v271 = vsub.f32 %v155, %v255
  %v272 = vsub.f32 %v160, %v256
  %v273 = vsub.f32 %v163, %v257
  %v274 = vsub.f32 %v168, %v258
  %v275 = vsub.f32 %v171, %v259
  %v276 = vsub.f32 %v176, %v260
  %v277 = vsub.f32 %v179, %v261
  %v278 = vsub.f32 %v184, %v262
  %v279 = vsub.f32 %v187, %v263
  %v280 = vsub.f32 %v192, %v264
  %v281 = vsub.f32 %v195, %v265
  %v282 = vmul.f32 %v266, %v266
  %v283 = vmul.f32 %v267, %v267
  %v284 = vmul.f32 %v268, %v268
  %v285 = vmul.f32 %v269, %v269
  %v286 = vmul.f32 %v270, %v270
  %v287 = vmul.f32 %v271, %v271
  %v288 = vmul.f32 %v272, %v272
  %v289 = vmul.f32 %v273, %v273
  %v290 = vmul.f32 %v274, %v274
  %v291 = vmul.f32 %v275, %v275
  %v292 = vmul.f32 %v276, %v276
  %v293 = vmul.f32 %v277, %v277
  %v294 = vmul.f32 %v278, %v278
  %v295 = vmul.f32 %v279, %v279
  %v296 = vmul.f32 %v280, %v280
  %v297 = vmul.f32 %v281, %v281
  %v298 = vsel %vm200, %v282, 0.0
  %299 = vadd.xlane.f32.xlu0 %v298
  %v300 = vpop.xlane.xlu0 %299
  %v301 = vsel %vm200, %v283, 0.0
  %302 = vadd.xlane.f32.xlu0 %v301
  %v303 = vpop.xlane.xlu0 %302
  %v304 = vsel %vm200, %v284, 0.0
  %305 = vadd.xlane.f32.xlu0 %v304
  %v306 = vpop.xlane.xlu0 %305
  %v307 = vsel %vm200, %v285, 0.0
  %308 = vadd.xlane.f32.xlu0 %v307
  %v309 = vpop.xlane.xlu0 %308
  %v310 = vsel %vm200, %v286, 0.0
  %311 = vadd.xlane.f32.xlu0 %v310
  %v312 = vpop.xlane.xlu0 %311
  %v313 = vsel %vm200, %v287, 0.0
  %314 = vadd.xlane.f32.xlu0 %v313
  %v315 = vpop.xlane.xlu0 %314
  %v316 = vsel %vm200, %v288, 0.0
  %317 = vadd.xlane.f32.xlu0 %v316
  %v318 = vpop.xlane.xlu0 %317
  %v319 = vsel %vm200, %v289, 0.0
  %320 = vadd.xlane.f32.xlu0 %v319
  %v321 = vpop.xlane.xlu0 %320
  %v322 = vsel %vm200, %v290, 0.0
  %323 = vadd.xlane.f32.xlu0 %v322
  %v324 = vpop.xlane.xlu0 %323
  %v325 = vsel %vm200, %v291, 0.0
  %326 = vadd.xlane.f32.xlu0 %v325
  %v327 = vpop.xlane.xlu0 %326
  %v328 = vsel %vm200, %v292, 0.0
  %329 = vadd.xlane.f32.xlu0 %v328
  %v330 = vpop.xlane.xlu0 %329
  %v331 = vsel %vm200, %v293, 0.0
  %332 = vadd.xlane.f32.xlu0 %v331
  %v333 = vpop.xlane.xlu0 %332
  %v334 = vsel %vm200, %v294, 0.0
  %335 = vadd.xlane.f32.xlu0 %v334
  %v336 = vpop.xlane.xlu0 %335
  %v337 = vsel %vm200, %v295, 0.0
  %338 = vadd.xlane.f32.xlu0 %v337
  %v339 = vpop.xlane.xlu0 %338
  %v340 = vsel %vm200, %v296, 0.0
  %341 = vadd.xlane.f32.xlu0 %v340
  %v342 = vpop.xlane.xlu0 %341
  %v343 = vsel %vm200, %v297, 0.0
  %344 = vadd.xlane.f32.xlu0 %v343
  %v345 = vpop.xlane.xlu0 %344
  %v346 = vmul.f32 %v300, %v249
  %v347 = vmul.f32 %v303, %v249
  %v348 = vmul.f32 %v306, %v249
  %v349 = vmul.f32 %v309, %v249
  %v350 = vmul.f32 %v312, %v249
  %v351 = vmul.f32 %v315, %v249
  %v352 = vmul.f32 %v318, %v249
  %v353 = vmul.f32 %v321, %v249
  %v354 = vmul.f32 %v324, %v249
  %v355 = vmul.f32 %v327, %v249
  %v356 = vmul.f32 %v330, %v249
  %v357 = vmul.f32 %v333, %v249
  %v358 = vmul.f32 %v336, %v249
  %v359 = vmul.f32 %v339, %v249
  %v360 = vmul.f32 %v342, %v249
  %v361 = vmul.f32 %v345, %v249
  %v362 = vadd.f32 %v346, 1e-06
  %v363 = vadd.f32 %v347, 1e-06
  %v364 = vadd.f32 %v348, 1e-06
  %v365 = vadd.f32 %v349, 1e-06
  %v366 = vadd.f32 %v350, 1e-06
  %v367 = vadd.f32 %v351, 1e-06
  %v368 = vadd.f32 %v352, 1e-06
  %v369 = vadd.f32 %v353, 1e-06
  %v370 = vadd.f32 %v354, 1e-06
  %v371 = vadd.f32 %v355, 1e-06
  %v372 = vadd.f32 %v356, 1e-06
  %v373 = vadd.f32 %v357, 1e-06
  %v374 = vadd.f32 %v358, 1e-06
  %v375 = vadd.f32 %v359, 1e-06
  %v376 = vadd.f32 %v360, 1e-06
  %v377 = vadd.f32 %v361, 1e-06
  %v378 = vrsqrt.pop %v362
  %v379 = vrsqrt.pop %v363
  %v380 = vrsqrt.pop %v364
  %v381 = vrsqrt.pop %v365
  %v382 = vrsqrt.pop %v366
  %v383 = vrsqrt.pop %v367
  %v384 = vrsqrt.pop %v368
  %v385 = vrsqrt.pop %v369
  %v386 = vrsqrt.pop %v370
  %v387 = vrsqrt.pop %v371
  %v388 = vrsqrt.pop %v372
  %v389 = vrsqrt.pop %v373
  %v390 = vrsqrt.pop %v374
  %v391 = vrsqrt.pop %v375
  %v392 = vrsqrt.pop %v376
  %v393 = vrsqrt.pop %v377
  %v394 = vmul.f32 %v266, %v378
  %v395 = vmul.f32 %v267, %v379
  %v396 = vmul.f32 %v268, %v380
  %v397 = vmul.f32 %v269, %v381
  %v398 = vmul.f32 %v270, %v382
  %v399 = vmul.f32 %v271, %v383
  %v400 = vmul.f32 %v272, %v384
  %v401 = vmul.f32 %v273, %v385
  %v402 = vmul.f32 %v274, %v386
  %v403 = vmul.f32 %v275, %v387
  %v404 = vmul.f32 %v276, %v388
  %v405 = vmul.f32 %v277, %v389
  %v406 = vmul.f32 %v278, %v390
  %v407 = vmul.f32 %v279, %v391
  %v408 = vmul.f32 %v280, %v392
  %v409 = vmul.f32 %v281, %v393
  %v411 = vlaneseq
  %v412 = vshrl.u32 %v411, 7
  %v413 = vsub.s32 0, %v412
  %v414 = vrot.slane %v198, %v413
  %v416 = vmul.f32 %v394, %v414
  %v417 = vmul.f32 %v395, %v414
  %v418 = vmul.f32 %v396, %v414
  %v419 = vmul.f32 %v397, %v414
  %v420 = vmul.f32 %v398, %v414
  %v421 = vmul.f32 %v399, %v414
  %v422 = vmul.f32 %v400, %v414
  %v423 = vmul.f32 %v401, %v414
  %v424 = vmul.f32 %v402, %v414
  %v425 = vmul.f32 %v403, %v414
  %v426 = vmul.f32 %v404, %v414
  %v427 = vmul.f32 %v405, %v414
  %v428 = vmul.f32 %v406, %v414
  %v429 = vmul.f32 %v407, %v414
  %v430 = vmul.f32 %v408, %v414
  %v431 = vmul.f32 %v409, %v414
  %v433 = vlaneseq
  %v434 = vshrl.u32 %v433, 7
  %v435 = vsub.s32 0, %v434
  %v436 = vrot.slane %v199, %v435
  %v438 = vadd.f32 %v416, %v436
  %v439 = vadd.f32 %v417, %v436
  %v440 = vadd.f32 %v418, %v436
  %v441 = vadd.f32 %v419, %v436
  %v442 = vadd.f32 %v420, %v436
  %v443 = vadd.f32 %v421, %v436
  %v444 = vadd.f32 %v422, %v436
  %v445 = vadd.f32 %v423, %v436
  %v446 = vadd.f32 %v424, %v436
  %v447 = vadd.f32 %v425, %v436
  %v448 = vadd.f32 %v426, %v436
  %v449 = vadd.f32 %v427, %v436
  %v450 = vadd.f32 %v428, %v436
  %v451 = vadd.f32 %v429, %v436
  %v452 = vadd.f32 %v430, %v436
  %v453 = vadd.f32 %v431, %v436
  %454 = vst.msk [vmem:[%s5] sm:$0xff] %vm200, %v438
  %455 = vst.msk [vmem:[%s5 + $0x8] sm:$0xff] %vm200, %v439
  %456 = vst.msk [vmem:[%s5 + $0x10] sm:$0xff] %vm200, %v440
  %457 = vst.msk [vmem:[%s5 + $0x18] sm:$0xff] %vm200, %v441
  %458 = vst.msk [vmem:[%s5 + $0x20] sm:$0xff] %vm200, %v442
  %459 = vst.msk [vmem:[%s5 + $0x28] sm:$0xff] %vm200, %v443
  %460 = vst.msk [vmem:[%s5 + $0x30] sm:$0xff] %vm200, %v444
  %461 = vst.msk [vmem:[%s5 + $0x38] sm:$0xff] %vm200, %v445
  %462 = vst.msk [vmem:[%s5 + $0x40] sm:$0xff] %vm200, %v446
  %463 = vst.msk [vmem:[%s5 + $0x48] sm:$0xff] %vm200, %v447
  %464 = vst.msk [vmem:[%s5 + $0x50] sm:$0xff] %vm200, %v448
  %465 = vst.msk [vmem:[%s5 + $0x58] sm:$0xff] %vm200, %v449
  %466 = vst.msk [vmem:[%s5 + $0x60] sm:$0xff] %vm200, %v450
  %467 = vst.msk [vmem:[%s5 + $0x68] sm:$0xff] %vm200, %v451
  %468 = vst.msk [vmem:[%s5 + $0x70] sm:$0xff] %vm200, %v452
  %469 = vst.msk [vmem:[%s5 + $0x78] sm:$0xff] %vm200, %v453
  // Predicated region
  $region22: #{tpu_custom_call.1} parent=0 // pred_check
    _
  $region23: #{tpu_custom_call.1} parent=0 // pred_check_branch
    %471 = sbr.rel (0) target = $region25
  $region24: #{tpu_custom_call.1} parent=0 // pred_region
    _
  $region25: #{tpu_custom_call.1} parent=0 // pred_fallthru
    _
  // Predicated region
  $region26: #{tpu_custom_call.1} parent=0 // pred_check
    _
  $region27: #{tpu_custom_call.1} parent=0 // pred_check_branch
    %473 = sbr.rel (0) target = $region29
  $region28: #{tpu_custom_call.1} parent=0 // pred_region
    _
  $region29: #{tpu_custom_call.1} parent=0 // pred_fallthru
    _

</llo_original>
